<compile_context>
chip_gen: v6e
topology: v6e:2x2x1
jax: 0.10.0
libtpu: 0.0.40
codegen_flags: <defaults>
</compile_context>

<pallas_src>
import functools
import math

import jax
import jax.numpy as jnp
from jax.experimental import pallas as pl
from jax.experimental.pallas import tpu as pltpu

LANE = 128
_SCALE = float(math.sqrt(0.5))


def _round_up(n, m):
    return ((n + m - 1) // m) * m


# ------------------------------ Pallas kernel ------------------------------ #

def _encoder_layer_kernel(emb_ref, w0_ref, b0_ref, wa_ref, wg_ref,
                          ba_ref, bg_ref, o_ref, *, k):
    """One (batch-block, layer) grid step of the fused encoder.

    grid = (num_batch_blocks [parallel], enc_num_layers [arbitrary]).

    emb_ref: (Bb, L, Ep)    bf16  token embeddings (fetched once per batch block)
    w0_ref:  (Ep, Hp)       bf16  emb2hidden weight (grid-invariant block)
    b0_ref:  (1, Hp)        f32
    wa_ref:  (1, k, Hp, Hp) bf16  this layer's conv weight, GLU 'a' half (streamed)
    wg_ref:  (1, k, Hp, Hp) bf16  this layer's conv weight, GLU gate half (streamed)
    ba_ref:  (1, 1, Hp)     f32   bg_ref: (1, 1, Hp) f32
    o_ref:   (Bb, L, Hp)    f32   activation accumulator; resident across the
                                  layer axis, written back once per batch block.
    """
    layer = pl.program_id(1)
    Bb, L, Hp = o_ref.shape
    R = Bb * L

    @pl.when(layer == 0)
    def _emb2hidden():
        # token embedding (+ the reference's identity "stack with pos_emb = 0"):
        # one bf16 matmul with f32 accumulation, bias added after the matmul.
        e = emb_ref[...].reshape(R, emb_ref.shape[-1])
        h = jnp.dot(e, w0_ref[...], preferred_element_type=jnp.float32)
        o_ref[...] = (h + b0_ref[...]).reshape(Bb, L, Hp)

    # dropout: eval-mode identity.
    x = o_ref[...].reshape(R, Hp)                    # f32 activation, rows = b*L + l

    # Causal conv taps as pure data movement (sublane roll + batch-boundary mask)
    # instead of MXU shift-matmuls; per-tap matmul accumulation avoids the
    # (R, k*Hp) concat buffer and keeps contraction K = Hp >= 128.
    # (If Hp < 256 on v6e/v7x and MXU occupancy dominates, the k*Hp concat form
    #  fills the 256-deep MXU better — tradeoff noted, per-tap chosen here.)
    pos = jax.lax.broadcasted_iota(jnp.int32, (R, Hp), 0) % L
    a = jnp.zeros((R, Hp), jnp.float32) + ba_ref[0]
    g = jnp.zeros((R, Hp), jnp.float32) + bg_ref[0]
    for s in range(k):                               # static unroll, k is tiny
        t = k - 1 - s                                # conv weight tap index
        if s == 0:
            tap = x
        else:
            # tap[b*L + l] = x[b*L + l - s] if l >= s else 0 (never crosses a batch
            # boundary thanks to the (pos % L) mask).  Roll/mask stay in f32.
            tap = jnp.where(pos >= s, pltpu.roll(x, shift=s, axis=0), 0.0)
        tap = tap.astype(jnp.bfloat16)               # bf16 MXU operands, f32 accum
        a = a + jnp.dot(tap, wa_ref[0, t], preferred_element_type=jnp.float32)
        g = g + jnp.dot(tap, wg_ref[0, t], preferred_element_type=jnp.float32)

    # GLU + ConvS2S residual, scaled by sqrt(0.5); elementwise kept f32 (v5e-safe).
    y = (a * jax.nn.sigmoid(g) + x) * jnp.float32(_SCALE)
    o_ref[...] = y.reshape(Bb, L, Hp)


# ------------------------- parameter init / packing ------------------------ #

def init_params(key, *, vocab_size, max_input_len, embedding_dim, hidden_dim,
                enc_kernel_size, enc_num_layers):
    """Parameters in PyTorch layouts (f32)."""
    ks = jax.random.split(key, 4 + 2 * enc_num_layers)
    p = {}
    p["token_emb"] = jax.random.normal(ks[0], (vocab_size, embedding_dim), jnp.float32)
    p["pos_emb"] = jax.random.normal(ks[1], (max_input_len, embedding_dim), jnp.float32)  # unused
    lim = 1.0 / (embedding_dim ** 0.5)
    p["w_e2h"] = jax.random.uniform(ks[2], (hidden_dim, embedding_dim), jnp.float32, -lim, lim)
    p["b_e2h"] = jax.random.uniform(ks[3], (hidden_dim,), jnp.float32, -lim, lim)
    climit = 1.0 / ((hidden_dim * enc_kernel_size) ** 0.5)
    p["conv_w"], p["conv_b"] = [], []
    for i in range(enc_num_layers):
        w = jax.random.uniform(ks[4 + 2 * i], (2 * hidden_dim, hidden_dim, enc_kernel_size),
                               jnp.float32, -climit, climit)   # torch Conv1d weight (2H, H, k)
        b = jax.random.uniform(ks[5 + 2 * i], (2 * hidden_dim,), jnp.float32, -climit, climit)
        p["conv_w"].append(w)
        p["conv_b"].append(b)
    return p


def pack_params(p, *, lane=LANE):
    """One-time layout prep: transpose, split GLU halves, zero-pad channels to the
    128-lane tile, cast matmul weights to bf16, keep biases f32."""
    E = p["token_emb"].shape[1]
    H = p["b_e2h"].shape[0]
    k = p["conv_w"][0].shape[2]
    Ep = _round_up(E, lane)
    Hp = _round_up(H, lane)

    packed = {}
    packed["token_emb"] = jnp.pad(p["token_emb"], ((0, 0), (0, Ep - E)))   # f32 gather table
    w0 = jnp.transpose(p["w_e2h"], (1, 0))                                 # (E, H)
    packed["w_e2h"] = jnp.pad(w0, ((0, Ep - E), (0, Hp - H))).astype(jnp.bfloat16)  # (Ep, Hp)
    packed["b_e2h"] = jnp.pad(p["b_e2h"], (0, Hp - H)).reshape(1, Hp)      # f32

    def prep_half(w_half):                                # (H, H, k) = (out, in, k)
        wt = jnp.transpose(w_half, (2, 1, 0))             # (k, in, out)
        wt = jnp.pad(wt, ((0, 0), (0, Hp - H), (0, Hp - H)))               # (k, Hp, Hp)
        return wt.astype(jnp.bfloat16)

    wa, wg, ba, bg = [], [], [], []
    for w, b in zip(p["conv_w"], p["conv_b"]):
        wa.append(prep_half(w[:H]))
        wg.append(prep_half(w[H:]))
        ba.append(jnp.pad(b[:H], (0, Hp - H)).reshape(1, Hp))
        bg.append(jnp.pad(b[H:], (0, Hp - H)).reshape(1, Hp))
    packed["conv_wa"] = jnp.stack(wa)    # (num_layers, k, Hp, Hp) bf16
    packed["conv_wg"] = jnp.stack(wg)
    packed["conv_ba"] = jnp.stack(ba)    # (num_layers, 1, Hp) f32
    packed["conv_bg"] = jnp.stack(bg)
    return packed


# -------------------------------- forward ---------------------------------- #

def _vmem_limit_bytes():
    """Generation-aware scoped-VMEM limit (v5e/v6e: 128 MiB physical -> ~96 MiB,
    v7x: 64 MiB physical -> ~48 MiB)."""
    try:
        cap = pltpu.get_tpu_info().vmem_capacity_bytes
        return int(cap) * 3 // 4
    except Exception:
        return 48 * 1024 * 1024


def _pick_batch_block(B, L, target_rows=512):
    """Largest divisor of B with batch_block * L <= target_rows (>= 1)."""
    bb = 1
    for d in range(1, B + 1):
        if B % d == 0 and d * L <= target_rows:
            bb = d
    return bb


@functools.partial(jax.jit, static_argnames=("hidden_dim", "batch_block"))
def cnn_encoder_forward(seq, packed, *, hidden_dim, batch_block=None):
    B, L = seq.shape
    num_layers, k, Hp, _ = packed["conv_wa"].shape

    # token-embedding gather (XLA glue outside the kernel); the reference's
    # `torch.stack(token_emb, pos_emb)` with pos_emb = 0 is an identity copy.
    emb = packed["token_emb"][seq].astype(jnp.bfloat16)       # (B, L, Ep), lane-padded
    Ep = emb.shape[-1]

    if batch_block is None:
        batch_block = _pick_batch_block(B, L)
    assert B % batch_block == 0, "batch_block must divide the batch size"
    nb = B // batch_block

    in_specs = [
        pl.BlockSpec((batch_block, L, Ep), lambda i, l: (i, 0, 0)),   # emb (per batch block)
        pl.BlockSpec((Ep, Hp), lambda i, l: (0, 0)),                  # w_e2h (grid-invariant)
        pl.BlockSpec((1, Hp), lambda i, l: (0, 0)),                   # b_e2h (grid-invariant)
        pl.BlockSpec((1, k, Hp, Hp), lambda i, l: (l, 0, 0, 0)),      # conv_wa (streamed/layer)
        pl.BlockSpec((1, k, Hp, Hp), lambda i, l: (l, 0, 0, 0)),      # conv_wg (streamed/layer)
        pl.BlockSpec((1, 1, Hp), lambda i, l: (l, 0, 0)),             # conv_ba
        pl.BlockSpec((1, 1, Hp), lambda i, l: (l, 0, 0)),             # conv_bg
    ]
    # Output block index is constant across the layer axis -> the f32 activation
    # stays VMEM-resident across layers and is written back once per batch block.
    out_specs = pl.BlockSpec((batch_block, L, Hp), lambda i, l: (i, 0, 0))

    out = pl.pallas_call(
        functools.partial(_encoder_layer_kernel, k=k),
        out_shape=jax.ShapeDtypeStruct((B, L, Hp), jnp.float32),
        grid=(nb, num_layers),
        in_specs=in_specs,
        out_specs=out_specs,
        compiler_params=pltpu.CompilerParams(
            dimension_semantics=("parallel", "arbitrary"),
            vmem_limit_bytes=_vmem_limit_bytes(),
        ),
        # TODO(synk): at production sizes, mark the grid-invariant operands
        # (w_e2h, b_e2h, emb) with pipeline_mode=pl.Buffered(1) to single-buffer
        # them and halve their VMEM footprint.
    )(emb, packed["w_e2h"], packed["b_e2h"],
      packed["conv_wa"], packed["conv_wg"], packed["conv_ba"], packed["conv_bg"])

    return out[:, :, :hidden_dim]


# ---------------------- pure-JAX reference (for checking) ------------------ #

def _reference_forward(seq, p):
    emb = p["token_emb"][seq]                                        # (B, L, E)
    x = jnp.einsum("ble,he->blh", emb, p["w_e2h"]) + p["b_e2h"]      # Linear
    H = p["b_e2h"].shape[0]
    k = p["conv_w"][0].shape[2]
    for w, b in zip(p["conv_w"], p["conv_b"]):
        L = x.shape[1]
        xpad = jnp.pad(x, ((0, 0), (k - 1, 0), (0, 0)))              # causal pad
        y = jnp.zeros(x.shape[:2] + (2 * H,), jnp.float32) + b
        for t in range(k):
            y = y + jnp.einsum("bli,oi->blo", xpad[:, t:t + L, :], w[:, :, t])
        a, g = y[..., :H], y[..., H:]
        x = (a * jax.nn.sigmoid(g) + x) * jnp.float32(_SCALE)
    return x


# ---------------------------------- main ------------------------------------ #

if __name__ == "__main__":
    EMBEDDING_DIM = 16
    HIDDEN_DIM = 32
    VOCAB_SIZE = 50
    MAX_INPUT_LEN = 16
    ENC_KERNEL_SIZE = 3
    ENC_NUM_LAYERS = 2
    DROPOUT_P = 0.1   # eval mode -> identity

    B, L = 2, 8

    key = jax.random.PRNGKey(0)
    k_param, k_seq = jax.random.split(key)
    params = init_params(
        k_param,
        vocab_size=VOCAB_SIZE,
        max_input_len=MAX_INPUT_LEN,
        embedding_dim=EMBEDDING_DIM,
        hidden_dim=HIDDEN_DIM,
        enc_kernel_size=ENC_KERNEL_SIZE,
        enc_num_layers=ENC_NUM_LAYERS,
    )
    packed = pack_params(params)
    seq = jax.random.randint(k_seq, (B, L), 0, VOCAB_SIZE, dtype=jnp.int32)

    # batch_block=1 -> grid = (2, num_layers): exercises both the "parallel"
    # batch axis (output writeback / emb re-fetch between batch blocks) and the
    # "arbitrary" layer axis (weight streaming + resident activation).
    out = cnn_encoder_forward(seq, packed, hidden_dim=HIDDEN_DIM, batch_block=1)
    out = jax.block_until_ready(out)
    assert out.shape == (B, L, HIDDEN_DIM) and out.dtype == jnp.float32

    ref = _reference_forward(seq, params)
    max_err = float(jnp.max(jnp.abs(out - ref)))
    assert max_err < 5e-2, f"mismatch vs pure-JAX reference: max abs err {max_err}"

    print("KERNEL_OK")
</pallas_src>

<mosaic_0001>
module attributes {stable_mosaic.version = 11 : i64} {
  func.func @_encoder_layer_kernel(%arg0: i32, %arg1: i32, %arg2: memref<1x8x128xbf16, #tpu.memory_space<vmem>>, %arg3: memref<128x128xbf16, #tpu.memory_space<vmem>>, %arg4: memref<1x128xf32, #tpu.memory_space<vmem>>, %arg5: memref<1x3x128x128xbf16, #tpu.memory_space<vmem>>, %arg6: memref<1x3x128x128xbf16, #tpu.memory_space<vmem>>, %arg7: memref<1x1x128xf32, #tpu.memory_space<vmem>>, %arg8: memref<1x1x128xf32, #tpu.memory_space<vmem>>, %arg9: memref<1x8x128xf32, #tpu.memory_space<vmem>>) attributes {dimension_semantics = [#tpu.dimension_semantics<parallel>, #tpu.dimension_semantics<arbitrary>], iteration_bounds = array<i64: 2, 2>, scalar_prefetch = 0 : i64, scratch_operands = 0 : i64, tpu.core_type = #tpu.core_type<tc>, window_params = [{transform_indices = @transform_0, window_bounds = array<i64: 1, 8, 128>}, {pipeline_mode = #tpu.pipeline_mode<synchronous>, transform_indices = @transform_1, window_bounds = array<i64: 128, 128>}, {pipeline_mode = #tpu.pipeline_mode<synchronous>, transform_indices = @transform_2, window_bounds = array<i64: 1, 128>}, {transform_indices = @transform_3, window_bounds = array<i64: 1, 3, 128, 128>}, {transform_indices = @transform_4, window_bounds = array<i64: 1, 3, 128, 128>}, {transform_indices = @transform_5, window_bounds = array<i64: 1, 1, 128>}, {transform_indices = @transform_6, window_bounds = array<i64: 1, 1, 128>}, {transform_indices = @transform_7, window_bounds = array<i64: 1, 8, 128>}]} {
    %c0_i32 = arith.constant 0 : i32
    %0 = arith.cmpi eq, %arg1, %c0_i32 : i32
    %1 = arith.extui %0 : i1 to i32
    %c0_i32_0 = arith.constant 0 : i32
    %2 = arith.cmpi ne, %1, %c0_i32_0 : i32
    scf.if %2 {
      %c0_52 = arith.constant 0 : index
      %c0_53 = arith.constant 0 : index
      %c0_54 = arith.constant 0 : index
      %80 = vector.load %arg2[%c0_52, %c0_53, %c0_54] : memref<1x8x128xbf16, #tpu.memory_space<vmem>>, vector<1x8x128xbf16>
      %81 = vector.shape_cast %80 : vector<1x8x128xbf16> to vector<8x128xbf16>
      %c0_55 = arith.constant 0 : index
      %c0_56 = arith.constant 0 : index
      %82 = vector.load %arg3[%c0_55, %c0_56] : memref<128x128xbf16, #tpu.memory_space<vmem>>, vector<128x128xbf16>
      %cst_57 = arith.constant dense<0.000000e+00> : vector<8x128xf32>
      %83 = tpu.matmul %81, %82, %cst_57 {dimension_numbers = #tpu.dot_dimension_numbers<[1], [0], [0], [1], [0, 0, 1, 1], [], []>} : vector<8x128xbf16>, vector<128x128xbf16>, vector<8x128xf32> -> vector<8x128xf32>
      %c0_58 = arith.constant 0 : index
      %c0_59 = arith.constant 0 : index
      %84 = vector.load %arg4[%c0_58, %c0_59] : memref<1x128xf32, #tpu.memory_space<vmem>>, vector<1x128xf32>
      %85 = vector.broadcast %84 : vector<1x128xf32> to vector<8x128xf32>
      %86 = arith.addf %83, %85 : vector<8x128xf32>
      %87 = vector.shape_cast %86 : vector<8x128xf32> to vector<1x8x128xf32>
      %c0_60 = arith.constant 0 : index
      %c0_61 = arith.constant 0 : index
      %c0_62 = arith.constant 0 : index
      %88 = vector.load %arg9[%c0_60, %c0_61, %c0_62] : memref<1x8x128xf32, #tpu.memory_space<vmem>>, vector<1x8x128xf32>
      tpu.vector_store %arg9[%c0_60, %c0_61, %c0_62], %87 {strides = array<i32>} : memref<1x8x128xf32, #tpu.memory_space<vmem>>, vector<1x8x128xf32>,
    } else {
    }
    %c0 = arith.constant 0 : index
    %c0_1 = arith.constant 0 : index
    %c0_2 = arith.constant 0 : index
    %3 = vector.load %arg9[%c0, %c0_1, %c0_2] : memref<1x8x128xf32, #tpu.memory_space<vmem>>, vector<1x8x128xf32>
    %4 = vector.shape_cast %3 : vector<1x8x128xf32> to vector<8x128xf32>
    %5 = tpu.iota {dimensions = array<i32: 0>} : vector<8x128xi32>
    %c8_i32 = arith.constant 8 : i32
    %c0_i32_3 = arith.constant 0 : i32
    %6 = arith.cmpi eq, %c8_i32, %c0_i32_3 : i32
    %c1_i32 = arith.constant 1 : i32
    %7 = arith.select %6, %c1_i32, %c8_i32 : i32
    %8 = vector.broadcast %7 : i32 to vector<8x128xi32>
    %9 = arith.remsi %5, %8 : vector<8x128xi32>
    %c0_i32_4 = arith.constant 0 : i32
    %10 = vector.broadcast %c0_i32_4 : i32 to vector<8x128xi32>
    %11 = arith.cmpi ne, %9, %10 : vector<8x128xi32>
    %c0_i32_5 = arith.constant 0 : i32
    %12 = vector.broadcast %c0_i32_5 : i32 to vector<8x128xi32>
    %13 = arith.cmpi slt, %9, %12 : vector<8x128xi32>
    %c0_i32_6 = arith.constant 0 : i32
    %14 = arith.cmpi slt, %7, %c0_i32_6 : i32
    %15 = vector.broadcast %14 : i1 to vector<8x128xi1>
    %16 = vector.broadcast %15 : vector<8x128xi1> to vector<8x128xi1>
    %17 = arith.xori %13, %16 : vector<8x128xi1>
    %18 = arith.andi %17, %11 : vector<8x128xi1>
    %19 = vector.broadcast %7 : i32 to vector<8x128xi32>
    %20 = arith.addi %9, %19 : vector<8x128xi32>
    %21 = arith.select %18, %20, %9 : vector<8x128xi1>, vector<8x128xi32>
    %cst = arith.constant 0.000000e+00 : f32
    %22 = vector.broadcast %cst : f32 to vector<8x128xf32>
    %c0_7 = arith.constant 0 : index
    %c0_8 = arith.constant 0 : index
    %c0_9 = arith.constant 0 : index
    %23 = vector.load %arg7[%c0_7, %c0_8, %c0_9] : memref<1x1x128xf32, #tpu.memory_space<vmem>>, vector<1x1x128xf32>
    %24 = vector.shape_cast %23 : vector<1x1x128xf32> to vector<1x128xf32>
    %25 = vector.broadcast %24 : vector<1x128xf32> to vector<8x128xf32>
    %26 = arith.addf %22, %25 : vector<8x128xf32>
    %cst_10 = arith.constant 0.000000e+00 : f32
    %27 = vector.broadcast %cst_10 : f32 to vector<8x128xf32>
    %c0_11 = arith.constant 0 : index
    %c0_12 = arith.constant 0 : index
    %c0_13 = arith.constant 0 : index
    %28 = vector.load %arg8[%c0_11, %c0_12, %c0_13] : memref<1x1x128xf32, #tpu.memory_space<vmem>>, vector<1x1x128xf32>
    %29 = vector.shape_cast %28 : vector<1x1x128xf32> to vector<1x128xf32>
    %30 = vector.broadcast %29 : vector<1x128xf32> to vector<8x128xf32>
    %31 = arith.addf %27, %30 : vector<8x128xf32>
    %32 = arith.truncf %4 : vector<8x128xf32> to vector<8x128xbf16>
    %c0_14 = arith.constant 0 : index
    %c2 = arith.constant 2 : index
    %c0_15 = arith.constant 0 : index
    %c0_16 = arith.constant 0 : index
    %33 = vector.load %arg5[%c0_14, %c2, %c0_15, %c0_16] : memref<1x3x128x128xbf16, #tpu.memory_space<vmem>>, vector<1x1x128x128xbf16>
    %34 = vector.shape_cast %33 : vector<1x1x128x128xbf16> to vector<128x128xbf16>
    %cst_17 = arith.constant dense<0.000000e+00> : vector<8x128xf32>
    %35 = tpu.matmul %32, %34, %cst_17 {dimension_numbers = #tpu.dot_dimension_numbers<[1], [0], [0], [1], [0, 0, 1, 1], [], []>} : vector<8x128xbf16>, vector<128x128xbf16>, vector<8x128xf32> -> vector<8x128xf32>
    %36 = arith.addf %26, %35 : vector<8x128xf32>
    %c0_18 = arith.constant 0 : index
    %c2_19 = arith.constant 2 : index
    %c0_20 = arith.constant 0 : index
    %c0_21 = arith.constant 0 : index
    %37 = vector.load %arg6[%c0_18, %c2_19, %c0_20, %c0_21] : memref<1x3x128x128xbf16, #tpu.memory_space<vmem>>, vector<1x1x128x128xbf16>
    %38 = vector.shape_cast %37 : vector<1x1x128x128xbf16> to vector<128x128xbf16>
    %cst_22 = arith.constant dense<0.000000e+00> : vector<8x128xf32>
    %39 = tpu.matmul %32, %38, %cst_22 {dimension_numbers = #tpu.dot_dimension_numbers<[1], [0], [0], [1], [0, 0, 1, 1], [], []>} : vector<8x128xbf16>, vector<128x128xbf16>, vector<8x128xf32> -> vector<8x128xf32>
    %40 = arith.addf %31, %39 : vector<8x128xf32>
    %c1_i32_23 = arith.constant 1 : i32
    %41 = vector.broadcast %c1_i32_23 : i32 to vector<8x128xi32>
    %42 = arith.cmpi sge, %21, %41 : vector<8x128xi32>
    %c1_i32_24 = arith.constant 1 : i32
    %43 = tpu.dynamic_rotate %4 by %c1_i32_24 dim 0 : vector<8x128xf32>, i32 -> vector<8x128xf32>
    %cst_25 = arith.constant 0.000000e+00 : f32
    %44 = vector.broadcast %cst_25 : f32 to vector<8x128xf32>
    %45 = arith.select %42, %43, %44 : vector<8x128xi1>, vector<8x128xf32>
    %46 = arith.truncf %45 : vector<8x128xf32> to vector<8x128xbf16>
    %c0_26 = arith.constant 0 : index
    %c1 = arith.constant 1 : index
    %c0_27 = arith.constant 0 : index
    %c0_28 = arith.constant 0 : index
    %47 = vector.load %arg5[%c0_26, %c1, %c0_27, %c0_28] : memref<1x3x128x128xbf16, #tpu.memory_space<vmem>>, vector<1x1x128x128xbf16>
    %48 = vector.shape_cast %47 : vector<1x1x128x128xbf16> to vector<128x128xbf16>
    %cst_29 = arith.constant dense<0.000000e+00> : vector<8x128xf32>
    %49 = tpu.matmul %46, %48, %cst_29 {dimension_numbers = #tpu.dot_dimension_numbers<[1], [0], [0], [1], [0, 0, 1, 1], [], []>} : vector<8x128xbf16>, vector<128x128xbf16>, vector<8x128xf32> -> vector<8x128xf32>
    %50 = arith.addf %36, %49 : vector<8x128xf32>
    %c0_30 = arith.constant 0 : index
    %c1_31 = arith.constant 1 : index
    %c0_32 = arith.constant 0 : index
    %c0_33 = arith.constant 0 : index
    %51 = vector.load %arg6[%c0_30, %c1_31, %c0_32, %c0_33] : memref<1x3x128x128xbf16, #tpu.memory_space<vmem>>, vector<1x1x128x128xbf16>
    %52 = vector.shape_cast %51 : vector<1x1x128x128xbf16> to vector<128x128xbf16>
    %cst_34 = arith.constant dense<0.000000e+00> : vector<8x128xf32>
    %53 = tpu.matmul %46, %52, %cst_34 {dimension_numbers = #tpu.dot_dimension_numbers<[1], [0], [0], [1], [0, 0, 1, 1], [], []>} : vector<8x128xbf16>, vector<128x128xbf16>, vector<8x128xf32> -> vector<8x128xf32>
    %54 = arith.addf %40, %53 : vector<8x128xf32>
    %c2_i32 = arith.constant 2 : i32
    %55 = vector.broadcast %c2_i32 : i32 to vector<8x128xi32>
    %56 = arith.cmpi sge, %21, %55 : vector<8x128xi32>
    %c2_i32_35 = arith.constant 2 : i32
    %57 = tpu.dynamic_rotate %4 by %c2_i32_35 dim 0 : vector<8x128xf32>, i32 -> vector<8x128xf32>
    %cst_36 = arith.constant 0.000000e+00 : f32
    %58 = vector.broadcast %cst_36 : f32 to vector<8x128xf32>
    %59 = arith.select %56, %57, %58 : vector<8x128xi1>, vector<8x128xf32>
    %60 = arith.truncf %59 : vector<8x128xf32> to vector<8x128xbf16>
    %c0_37 = arith.constant 0 : index
    %c0_38 = arith.constant 0 : index
    %c0_39 = arith.constant 0 : index
    %c0_40 = arith.constant 0 : index
    %61 = vector.load %arg5[%c0_37, %c0_38, %c0_39, %c0_40] : memref<1x3x128x128xbf16, #tpu.memory_space<vmem>>, vector<1x1x128x128xbf16>
    %62 = vector.shape_cast %61 : vector<1x1x128x128xbf16> to vector<128x128xbf16>
    %cst_41 = arith.constant dense<0.000000e+00> : vector<8x128xf32>
    %63 = tpu.matmul %60, %62, %cst_41 {dimension_numbers = #tpu.dot_dimension_numbers<[1], [0], [0], [1], [0, 0, 1, 1], [], []>} : vector<8x128xbf16>, vector<128x128xbf16>, vector<8x128xf32> -> vector<8x128xf32>
    %64 = arith.addf %50, %63 : vector<8x128xf32>
    %c0_42 = arith.constant 0 : index
    %c0_43 = arith.constant 0 : index
    %c0_44 = arith.constant 0 : index
    %c0_45 = arith.constant 0 : index
    %65 = vector.load %arg6[%c0_42, %c0_43, %c0_44, %c0_45] : memref<1x3x128x128xbf16, #tpu.memory_space<vmem>>, vector<1x1x128x128xbf16>
    %66 = vector.shape_cast %65 : vector<1x1x128x128xbf16> to vector<128x128xbf16>
    %cst_46 = arith.constant dense<0.000000e+00> : vector<8x128xf32>
    %67 = tpu.matmul %60, %66, %cst_46 {dimension_numbers = #tpu.dot_dimension_numbers<[1], [0], [0], [1], [0, 0, 1, 1], [], []>} : vector<8x128xbf16>, vector<128x128xbf16>, vector<8x128xf32> -> vector<8x128xf32>
    %68 = arith.addf %54, %67 : vector<8x128xf32>
    %69 = arith.negf %68 : vector<8x128xf32>
    %70 = math.exp %69 : vector<8x128xf32>
    %cst_47 = arith.constant 1.000000e+00 : f32
    %71 = vector.broadcast %cst_47 : f32 to vector<8x128xf32>
    %72 = arith.addf %71, %70 : vector<8x128xf32>
    %73 = arith.divf %71, %72 : vector<8x128xf32>
    %74 = arith.mulf %64, %73 : vector<8x128xf32>
    %75 = arith.addf %74, %4 : vector<8x128xf32>
    %cst_48 = arith.constant 0.707106769 : f32
    %76 = vector.broadcast %cst_48 : f32 to vector<8x128xf32>
    %77 = arith.mulf %75, %76 : vector<8x128xf32>
    %78 = vector.shape_cast %77 : vector<8x128xf32> to vector<1x8x128xf32>
    %c0_49 = arith.constant 0 : index
    %c0_50 = arith.constant 0 : index
    %c0_51 = arith.constant 0 : index
    %79 = vector.load %arg9[%c0_49, %c0_50, %c0_51] : memref<1x8x128xf32, #tpu.memory_space<vmem>>, vector<1x8x128xf32>
    tpu.vector_store %arg9[%c0_49, %c0_50, %c0_51], %78 {strides = array<i32>} : memref<1x8x128xf32, #tpu.memory_space<vmem>>, vector<1x8x128xf32>,
    return
  }
  func.func @transform_0(%arg0: i32, %arg1: i32) -> (i32, i32, i32) {
    %c0_i32 = arith.constant 0 : i32
    %c0_i32_0 = arith.constant 0 : i32
    %c0_i32_1 = arith.constant 0 : i32
    return %arg0, %c0_i32, %c0_i32_0 : i32, i32, i32
  }
  func.func @transform_1(%arg0: i32, %arg1: i32) -> (i32, i32) {
    %c0_i32 = arith.constant 0 : i32
    %c0_i32_0 = arith.constant 0 : i32
    %c0_i32_1 = arith.constant 0 : i32
    return %c0_i32, %c0_i32_0 : i32, i32
  }
  func.func @transform_2(%arg0: i32, %arg1: i32) -> (i32, i32) {
    %c0_i32 = arith.constant 0 : i32
    %c0_i32_0 = arith.constant 0 : i32
    %c0_i32_1 = arith.constant 0 : i32
    return %c0_i32, %c0_i32_0 : i32, i32
  }
  func.func @transform_3(%arg0: i32, %arg1: i32) -> (i32, i32, i32, i32) {
    %c0_i32 = arith.constant 0 : i32
    %c0_i32_0 = arith.constant 0 : i32
    %c0_i32_1 = arith.constant 0 : i32
    %c0_i32_2 = arith.constant 0 : i32
    return %arg1, %c0_i32, %c0_i32_0, %c0_i32_1 : i32, i32, i32, i32
  }
  func.func @transform_4(%arg0: i32, %arg1: i32) -> (i32, i32, i32, i32) {
    %c0_i32 = arith.constant 0 : i32
    %c0_i32_0 = arith.constant 0 : i32
    %c0_i32_1 = arith.constant 0 : i32
    %c0_i32_2 = arith.constant 0 : i32
    return %arg1, %c0_i32, %c0_i32_0, %c0_i32_1 : i32, i32, i32, i32
  }
  func.func @transform_5(%arg0: i32, %arg1: i32) -> (i32, i32, i32) {
    %c0_i32 = arith.constant 0 : i32
    %c0_i32_0 = arith.constant 0 : i32
    %c0_i32_1 = arith.constant 0 : i32
    return %arg1, %c0_i32, %c0_i32_0 : i32, i32, i32
  }
  func.func @transform_6(%arg0: i32, %arg1: i32) -> (i32, i32, i32) {
    %c0_i32 = arith.constant 0 : i32
    %c0_i32_0 = arith.constant 0 : i32
    %c0_i32_1 = arith.constant 0 : i32
    return %arg1, %c0_i32, %c0_i32_0 : i32, i32, i32
  }
  func.func @transform_7(%arg0: i32, %arg1: i32) -> (i32, i32, i32) {
    %c0_i32 = arith.constant 0 : i32
    %c0_i32_0 = arith.constant 0 : i32
    %c0_i32_1 = arith.constant 0 : i32
    return %arg0, %c0_i32, %c0_i32_0 : i32, i32, i32
  }
}

</mosaic_0001>

<llo_original>
// kernel: cnn_encoder_forward.1
$region0: #{cnn_encoder_forward.1}
  #allocation0 [shape = 'u32[]', space=smem, size = 0x4, offset = 0x4, fixed_abs, tag = 'smem constant byte address 0x4 - core index']
  #allocation1 [shape = 'u32[144,128]{1,0:T(1,128)}', space=vmem, size = 0x12000, scoped, tag = 'internal scratch']
  %s0 = inlined_call_operand.vmem [shape: bf16[2,8,128], index: 0, kind: input, shape index: {}]
  %s1 = inlined_call_operand.vmem [shape: bf16[128,128], index: 1, kind: input, shape index: {}]
  %s2 = inlined_call_operand.vmem [shape: f32[1,128], index: 2, kind: input, shape index: {}]
  %s3 = inlined_call_operand.hbm [shape: bf16[2,3,128,128], index: 3, kind: input, shape index: {}]
  %s4 = inlined_call_operand.hbm [shape: bf16[2,3,128,128], index: 4, kind: input, shape index: {}]
  %s5 = inlined_call_operand.vmem [shape: f32[2,1,128], index: 5, kind: input, shape index: {}]
  %s6 = inlined_call_operand.vmem [shape: f32[2,1,128], index: 6, kind: input, shape index: {}]
  %s7 = inlined_call_operand.hbm [shape: f32[2,8,128], index: 7, kind: output, shape index: {}]
  %s8 = sld [smem:[#allocation0]]
  $region73: #{cnn_encoder_forward.1} parent=0
    _
  %s10 = ssub.s32 1, %s8
  %s11 = scalar_select 0, %s10, %s8
  $region1: #{cnn_encoder_forward.1} parent=0
    #allocation2 [shape = 'u8[196608]{0}', space=vmem, size = 0x30000, scoped, tag = 'input window, operand 3']
    #allocation3 [shape = 's32[2]{0}', space=sflag, size = 0x8, scoped, tag = 'scoped memory for cnn_encoder_forward.1']
    #allocation4 [shape = 's32[2]{0}', space=sflag, size = 0x8, scoped, tag = 'scoped memory for cnn_encoder_forward.1']
    #allocation5 [shape = 'u8[196608]{0}', space=vmem, size = 0x30000, scoped, tag = 'input window, operand 4']
    #allocation6 [shape = 's32[2]{0}', space=sflag, size = 0x8, scoped, tag = 'scoped memory for cnn_encoder_forward.1']
    #allocation7 [shape = 'u8[8192]{0}', space=vmem, size = 0x2000, scoped, tag = 'output window, operand 0']
    %12 = vsyncpa [#allocation3], 0
    %s13 = scalar_lea.sflag [#allocation3], 1
    %14 = vsyncpa %s13, 0
    %15 = vsyncpa [#allocation6], 0
    %s16 = scalar_lea.sflag [#allocation6], 1
    %17 = vsyncpa %s16, 0
    %18 = vsyncpa [#allocation4], 0
    %s19 = scalar_lea.sflag [#allocation4], 1
    %20 = vsyncpa %s19, 0
    loop: start=0, step=1, limit=6
    $region2: #{cnn_encoder_forward.1} parent=1 // loop_pre_header
      _
    $region3: #{cnn_encoder_forward.1} parent=1 // loop_header
      %s22 = sphi 0, %s26
      %p23 = scmp.ge.s32.totalorder %s22, 6
      %s29 = sphi 0, %s41
      %s30 = sphi 0, %s37
      %s31 = sphi 0, %s29
      %s32 = sphi 0, %s30
      %s33 = sphi 0, %s31
      %s34 = sphi 0, %s32
      %s44 = sphi 0, %s46
      %s47 = sphi 0, %s44
      %s48 = sphi 0, %s47
      %s64 = sphi 0, %s48
      %s68 = sphi 0, %s68
      %s70 = sphi 0, %s68
      %s71 = sphi 0, %s70
      %s85 = sphi 0, %s71
      %s89 = sphi 0, %s89
      %s91 = sphi 0, %s89
      %s92 = sphi 0, %s91
      %s106 = sphi 0, %s92
      %s112 = sphi 0, %s114
      %s115 = sphi 0, %s112
      %s116 = sphi 0, %s115
      %s132 = sphi 0, %s116
      %s138 = sphi 0, %s140
      %s141 = sphi 0, %s138
      %s142 = sphi 0, %s141
      %s158 = sphi 0, %s142
      %s164 = sphi 0, %s166
      %s167 = sphi 0, %s164
      %s168 = sphi 0, %s167
      %s184 = sphi 0, %s168
      %s190 = sphi 0, %s192
      %s193 = sphi 0, %s190
      %s194 = sphi 0, %s193
      %s210 = sphi 0, %s194
      %s216 = sphi 0, %s218
      %s219 = sphi 0, %s216
      %s220 = sphi 0, %s219
      %s236 = sphi 0, %s220
    $region4: #{cnn_encoder_forward.1} parent=1 // loop_header_branch
      %25 = sbr.rel (%p23) target = $region8
    $region5: #{cnn_encoder_forward.1} parent=1 // loop_body
      %s27 = ssub.s32 %s22, 1
      %s28 = ssub.s32 %s22, 2
      %s35 = sadd.s32 1, %s30
      %p36 = scmp.ge.s32.totalorder %s35, 2
      %s37 = scalar_select %p36, 0, %s35
      %s38 = sadd.s32 1, %s29
      %s39 = scalar_select %p36, %s38, %s29
      %p40 = scmp.ge.s32.totalorder %s39, 2
      %s41 = scalar_select %p40, 0, %s39
      %s42 = ssub.s32 %s29, %s41
      %p43 = scmp.eq.s32.totalorder %s42, 0
      %s45 = sadd.s32 %s44, 1
      %s46 = scalar_select %p43, %s44, %s45
      %p49 = pneg %p43
      %p50 = scmp.eq.s32.totalorder %s22, 3
      %p51 = por %p49, %p50
      %p52 = scmp.ne.s32.totalorder %s44, %s47
      %p53 = scmp.eq.s32.totalorder %s22, 0
      %p54 = por %p52, %p53
      %p55 = scmp.ne.s32.totalorder %s44, %s47
      %p56 = scmp.eq.s32.totalorder %s27, 3
      %p57 = por %p55, %p56
      %p58 = scmp.ne.s32.totalorder %s47, %s48
      %p59 = scmp.eq.s32.totalorder %s27, 0
      %p60 = por %p58, %p59
      %p61 = scmp.ne.s32.totalorder %s47, %s48
      %p62 = scmp.eq.s32.totalorder %s28, 3
      %p63 = por %p61, %p62
      %p65 = scmp.ne.s32.totalorder %s48, %s64
      %p66 = scmp.eq.s32.totalorder %s28, 0
      %p67 = por %p65, %p66
      %s69 = sadd.s32 %s68, 1
      %p72 = scmp.eq.s32.totalorder %s22, 3
      %p73 = scmp.ne.s32.totalorder %s68, %s70
      %p74 = scmp.eq.s32.totalorder %s22, 0
      %p75 = por %p73, %p74
      %p76 = scmp.ne.s32.totalorder %s68, %s70
      %p77 = scmp.eq.s32.totalorder %s27, 3
      %p78 = por %p76, %p77
      %p79 = scmp.ne.s32.totalorder %s70, %s71
      %p80 = scmp.eq.s32.totalorder %s27, 0
      %p81 = por %p79, %p80
      %p82 = scmp.ne.s32.totalorder %s70, %s71
      %p83 = scmp.eq.s32.totalorder %s28, 3
      %p84 = por %p82, %p83
      %p86 = scmp.ne.s32.totalorder %s71, %s85
      %p87 = scmp.eq.s32.totalorder %s28, 0
      %p88 = por %p86, %p87
      %s90 = sadd.s32 %s89, 1
      %p93 = scmp.eq.s32.totalorder %s22, 3
      %p94 = scmp.ne.s32.totalorder %s89, %s91
      %p95 = scmp.eq.s32.totalorder %s22, 0
      %p96 = por %p94, %p95
      %p97 = scmp.ne.s32.totalorder %s89, %s91
      %p98 = scmp.eq.s32.totalorder %s27, 3
      %p99 = por %p97, %p98
      %p100 = scmp.ne.s32.totalorder %s91, %s92
      %p101 = scmp.eq.s32.totalorder %s27, 0
      %p102 = por %p100, %p101
      %p103 = scmp.ne.s32.totalorder %s91, %s92
      %p104 = scmp.eq.s32.totalorder %s28, 3
      %p105 = por %p103, %p104
      %p107 = scmp.ne.s32.totalorder %s92, %s106
      %p108 = scmp.eq.s32.totalorder %s28, 0
      %p109 = por %p107, %p108
      %s110 = ssub.s32 %s30, %s37
      %p111 = scmp.eq.s32.totalorder %s110, 0
      %s113 = sadd.s32 %s112, 1
      %s114 = scalar_select %p111, %s112, %s113
      %p117 = pneg %p111
      %p118 = scmp.eq.s32.totalorder %s22, 3
      %p119 = por %p117, %p118
      %p120 = scmp.ne.s32.totalorder %s112, %s115
      %p121 = scmp.eq.s32.totalorder %s22, 0
      %p122 = por %p120, %p121
      %p123 = scmp.ne.s32.totalorder %s112, %s115
      %p124 = scmp.eq.s32.totalorder %s27, 3
      %p125 = por %p123, %p124
      %p126 = scmp.ne.s32.totalorder %s115, %s116
      %p127 = scmp.eq.s32.totalorder %s27, 0
      %p128 = por %p126, %p127
      %p129 = scmp.ne.s32.totalorder %s115, %s116
      %p130 = scmp.eq.s32.totalorder %s28, 3
      %p131 = por %p129, %p130
      %p133 = scmp.ne.s32.totalorder %s116, %s132
      %p134 = scmp.eq.s32.totalorder %s28, 0
      %p135 = por %p133, %p134
      %s136 = ssub.s32 %s30, %s37
      %p137 = scmp.eq.s32.totalorder %s136, 0
      %s139 = sadd.s32 %s138, 1
      %s140 = scalar_select %p137, %s138, %s139
      %p143 = pneg %p137
      %p144 = scmp.eq.s32.totalorder %s22, 3
      %p145 = por %p143, %p144
      %p146 = scmp.ne.s32.totalorder %s138, %s141
      %p147 = scmp.eq.s32.totalorder %s22, 0
      %p148 = por %p146, %p147
      %p149 = scmp.ne.s32.totalorder %s138, %s141
      %p150 = scmp.eq.s32.totalorder %s27, 3
      %p151 = por %p149, %p150
      %p152 = scmp.ne.s32.totalorder %s141, %s142
      %p153 = scmp.eq.s32.totalorder %s27, 0
      %p154 = por %p152, %p153
      %p155 = scmp.ne.s32.totalorder %s141, %s142
      %p156 = scmp.eq.s32.totalorder %s28, 3
      %p157 = por %p155, %p156
      %p159 = scmp.ne.s32.totalorder %s142, %s158
      %p160 = scmp.eq.s32.totalorder %s28, 0
      %p161 = por %p159, %p160
      %s162 = ssub.s32 %s30, %s37
      %p163 = scmp.eq.s32.totalorder %s162, 0
      %s165 = sadd.s32 %s164, 1
      %s166 = scalar_select %p163, %s164, %s165
      %p169 = pneg %p163
      %p170 = scmp.eq.s32.totalorder %s22, 3
      %p171 = por %p169, %p170
      %p172 = scmp.ne.s32.totalorder %s164, %s167
      %p173 = scmp.eq.s32.totalorder %s22, 0
      %p174 = por %p172, %p173
      %p175 = scmp.ne.s32.totalorder %s164, %s167
      %p176 = scmp.eq.s32.totalorder %s27, 3
      %p177 = por %p175, %p176
      %p178 = scmp.ne.s32.totalorder %s167, %s168
      %p179 = scmp.eq.s32.totalorder %s27, 0
      %p180 = por %p178, %p179
      %p181 = scmp.ne.s32.totalorder %s167, %s168
      %p182 = scmp.eq.s32.totalorder %s28, 3
      %p183 = por %p181, %p182
      %p185 = scmp.ne.s32.totalorder %s168, %s184
      %p186 = scmp.eq.s32.totalorder %s28, 0
      %p187 = por %p185, %p186
      %s188 = ssub.s32 %s30, %s37
      %p189 = scmp.eq.s32.totalorder %s188, 0
      %s191 = sadd.s32 %s190, 1
      %s192 = scalar_select %p189, %s190, %s191
      %p195 = pneg %p189
      %p196 = scmp.eq.s32.totalorder %s22, 3
      %p197 = por %p195, %p196
      %p198 = scmp.ne.s32.totalorder %s190, %s193
      %p199 = scmp.eq.s32.totalorder %s22, 0
      %p200 = por %p198, %p199
      %p201 = scmp.ne.s32.totalorder %s190, %s193
      %p202 = scmp.eq.s32.totalorder %s27, 3
      %p203 = por %p201, %p202
      %p204 = scmp.ne.s32.totalorder %s193, %s194
      %p205 = scmp.eq.s32.totalorder %s27, 0
      %p206 = por %p204, %p205
      %p207 = scmp.ne.s32.totalorder %s193, %s194
      %p208 = scmp.eq.s32.totalorder %s28, 3
      %p209 = por %p207, %p208
      %p211 = scmp.ne.s32.totalorder %s194, %s210
      %p212 = scmp.eq.s32.totalorder %s28, 0
      %p213 = por %p211, %p212
      %s214 = ssub.s32 %s29, %s41
      %p215 = scmp.eq.s32.totalorder %s214, 0
      %s217 = sadd.s32 %s216, 1
      %s218 = scalar_select %p215, %s216, %s217
      %p221 = pneg %p215
      %p222 = scmp.eq.s32.totalorder %s22, 3
      %p223 = por %p221, %p222
      %p224 = scmp.ne.s32.totalorder %s216, %s219
      %p225 = scmp.eq.s32.totalorder %s22, 0
      %p226 = por %p224, %p225
      %p227 = scmp.ne.s32.totalorder %s216, %s219
      %p228 = scmp.eq.s32.totalorder %s27, 3
      %p229 = por %p227, %p228
      %p230 = scmp.ne.s32.totalorder %s219, %s220
      %p231 = scmp.eq.s32.totalorder %s27, 0
      %p232 = por %p230, %p231
      %p233 = scmp.ne.s32.totalorder %s219, %s220
      %p234 = scmp.eq.s32.totalorder %s28, 3
      %p235 = por %p233, %p234
      %p237 = scmp.ne.s32.totalorder %s220, %s236
      %p238 = scmp.eq.s32.totalorder %s28, 0
      %p239 = por %p237, %p238
      %p240 = scmp.le.s32.totalorder 1, %s22
      %p241 = scmp.lt.s32.totalorder %s22, 5
      %p242 = pnand %p240, %p241
      %p243 = pneg %p242
      // Predicated region
      $region9: #{cnn_encoder_forward.1} parent=5 // pred_check
        _
      $region10: #{cnn_encoder_forward.1} parent=5 // pred_check_branch
        %245 = sbr.rel (%p242) target = $region12
      $region11: #{cnn_encoder_forward.1} parent=5 // pred_region
        %s246 = ssub.s32 %s22, 1
        // Predicated region
        $region13: #{cnn_encoder_forward.1} parent=11 // pred_check
          %p247 = pneg %p81
        $region14: #{cnn_encoder_forward.1} parent=11 // pred_check_branch
          %249 = sbr.rel (%p247) target = $region16
        $region15: #{cnn_encoder_forward.1} parent=11 // pred_region
          _
        $region16: #{cnn_encoder_forward.1} parent=11 // pred_fallthru
          _
        // Predicated region
        $region17: #{cnn_encoder_forward.1} parent=11 // pred_check
          %p250 = pneg %p102
        $region18: #{cnn_encoder_forward.1} parent=11 // pred_check_branch
          %252 = sbr.rel (%p250) target = $region20
        $region19: #{cnn_encoder_forward.1} parent=11 // pred_region
          _
        $region20: #{cnn_encoder_forward.1} parent=11 // pred_fallthru
          _
      $region12: #{cnn_encoder_forward.1} parent=5 // pred_fallthru
        _
      %p253 = scmp.lt.s32.totalorder %s22, 4
      // Predicated region
      $region21: #{cnn_encoder_forward.1} parent=5 // pred_check
        %p254 = pneg %p253
      $region22: #{cnn_encoder_forward.1} parent=5 // pred_check_branch
        %256 = sbr.rel (%p254) target = $region24
      $region23: #{cnn_encoder_forward.1} parent=5 // pred_region
        // Predicated region
        $region25: #{cnn_encoder_forward.1} parent=23 // pred_check
          %p257 = pneg %p54
        $region26: #{cnn_encoder_forward.1} parent=23 // pred_check_branch
          %259 = sbr.rel (%p257) target = $region28
        $region27: #{cnn_encoder_forward.1} parent=23 // pred_region
          %p260 = scmp.lt.s32.totalorder %s29, 1
          %s261 = scalar_select %p260, %s29, 1
          %s262 = smul.addr %s261, 4
          %s263 = scalar_lea.vmem %s0, %s262
        $region28: #{cnn_encoder_forward.1} parent=23 // pred_fallthru
          _
        // Predicated region
        $region29: #{cnn_encoder_forward.1} parent=23 // pred_check
          %p264 = pneg %p122
        $region30: #{cnn_encoder_forward.1} parent=23 // pred_check_branch
          %266 = sbr.rel (%p264) target = $region32
        $region31: #{cnn_encoder_forward.1} parent=23 // pred_region
          %s267 = sand.u32 %s112, 1
          %s268 = scalar_lea.sflag [#allocation3], %s267
          %s269 = sand.u32 %s112, 1
          %s270 = smul.addr %s269, 192
          %s271 = scalar_lea.vmem [#allocation2], %s270
          %s273 = ssub.s32 3072, 3072
          %274 = vsyncadd %s268, %s273
          %s275 = smul.addr %s30, 48
          %s276 = smul.addr %s275, 64
          %s277 = scalar_lea.hbm %s3, %s276
          %s278 = sshll.u32 %s271, 4
          %s279 = int_to_ptr.vmem [resolvable:$true] %s278
          %284 = dma.hbm_to_vmem [thread:$0]  %s277, 3072, %s279, %s268, 64, 64, 4
        $region32: #{cnn_encoder_forward.1} parent=23 // pred_fallthru
          _
        // Predicated region
        $region33: #{cnn_encoder_forward.1} parent=23 // pred_check
          %p285 = pneg %p148
        $region34: #{cnn_encoder_forward.1} parent=23 // pred_check_branch
          %287 = sbr.rel (%p285) target = $region36
        $region35: #{cnn_encoder_forward.1} parent=23 // pred_region
          %s288 = sand.u32 %s138, 1
          %s289 = scalar_lea.sflag [#allocation6], %s288
          %s290 = sand.u32 %s138, 1
          %s291 = smul.addr %s290, 192
          %s292 = scalar_lea.vmem [#allocation5], %s291
          %s294 = ssub.s32 3072, 3072
          %295 = vsyncadd %s289, %s294
          %s296 = smul.addr %s30, 48
          %s297 = smul.addr %s296, 64
          %s298 = scalar_lea.hbm %s4, %s297
          %s299 = sshll.u32 %s292, 4
          %s300 = int_to_ptr.vmem [resolvable:$true] %s299
          %305 = dma.hbm_to_vmem [thread:$0]  %s298, 3072, %s300, %s289, 64, 64, 4
        $region36: #{cnn_encoder_forward.1} parent=23 // pred_fallthru
          _
        // Predicated region
        $region37: #{cnn_encoder_forward.1} parent=23 // pred_check
          %p306 = pneg %p174
        $region38: #{cnn_encoder_forward.1} parent=23 // pred_check_branch
          %308 = sbr.rel (%p306) target = $region40
        $region39: #{cnn_encoder_forward.1} parent=23 // pred_region
          %p309 = scmp.lt.s32.totalorder %s30, 1
          %s310 = scalar_select %p309, %s30, 1
          %s311 = scalar_lea.vmem %s5, %s310
        $region40: #{cnn_encoder_forward.1} parent=23 // pred_fallthru
          _
        // Predicated region
        $region41: #{cnn_encoder_forward.1} parent=23 // pred_check
          %p312 = pneg %p200
        $region42: #{cnn_encoder_forward.1} parent=23 // pred_check_branch
          %314 = sbr.rel (%p312) target = $region44
        $region43: #{cnn_encoder_forward.1} parent=23 // pred_region
          %p315 = scmp.lt.s32.totalorder %s30, 1
          %s316 = scalar_select %p315, %s30, 1
          %s317 = scalar_lea.vmem %s6, %s316
        $region44: #{cnn_encoder_forward.1} parent=23 // pred_fallthru
          _
      $region24: #{cnn_encoder_forward.1} parent=5 // pred_fallthru
        _
      %p318 = scmp.le.s32.totalorder 1, %s22
      %p319 = scmp.lt.s32.totalorder %s22, 5
      %p320 = pnand %p318, %p319
      %p321 = pneg %p320
      // Predicated region
      $region45: #{cnn_encoder_forward.1} parent=5 // pred_check
        _
      $region46: #{cnn_encoder_forward.1} parent=5 // pred_check_branch
        %323 = sbr.rel (%p320) target = $region48
      $region47: #{cnn_encoder_forward.1} parent=5 // pred_region
        %s324 = ssub.s32 %s22, 1
        %s325 = sand.u32 %s115, 1
        %s326 = scalar_lea.sflag [#allocation3], %s325
        %s327 = sand.u32 %s115, 1
        %s328 = smul.addr %s327, 192
        %s329 = scalar_lea.vmem [#allocation2], %s328
        // Predicated region
        $region49: #{cnn_encoder_forward.1} parent=47 // pred_check
          %p330 = pneg %p128
        $region50: #{cnn_encoder_forward.1} parent=47 // pred_check_branch
          %332 = sbr.rel (%p330) target = $region52
        $region51: #{cnn_encoder_forward.1} parent=47 // pred_region
          %333 = dma.done %s326, 3072
        $region52: #{cnn_encoder_forward.1} parent=47 // pred_fallthru
          _
        %s334 = sand.u32 %s141, 1
        %s335 = scalar_lea.sflag [#allocation6], %s334
        %s336 = sand.u32 %s141, 1
        %s337 = smul.addr %s336, 192
        %s338 = scalar_lea.vmem [#allocation5], %s337
        // Predicated region
        $region53: #{cnn_encoder_forward.1} parent=47 // pred_check
          %p339 = pneg %p154
        $region54: #{cnn_encoder_forward.1} parent=47 // pred_check_branch
          %341 = sbr.rel (%p339) target = $region56
        $region55: #{cnn_encoder_forward.1} parent=47 // pred_region
          %342 = dma.done %s335, 3072
        $region56: #{cnn_encoder_forward.1} parent=47 // pred_fallthru
          _
        %p343 = scmp.lt.s32.totalorder %s31, 1
        %s344 = scalar_select %p343, %s31, 1
        %s345 = smul.addr %s344, 4
        %s346 = scalar_lea.vmem %s0, %s345
        %p347 = pneg %p60
        %p348 = pneg %p57
        %p349 = pneg %p81
        %p350 = pneg %p78
        %p351 = pneg %p102
        %p352 = pneg %p99
        %s353 = sand.u32 %s115, 1
        %s354 = scalar_lea.sflag [#allocation3], %s353
        %s355 = sand.u32 %s115, 1
        %s356 = smul.addr %s355, 192
        %s357 = scalar_lea.vmem [#allocation2], %s356
        %p358 = pneg %p128
        %p359 = pneg %p125
        %s360 = sand.u32 %s141, 1
        %s361 = scalar_lea.sflag [#allocation6], %s360
        %s362 = sand.u32 %s141, 1
        %s363 = smul.addr %s362, 192
        %s364 = scalar_lea.vmem [#allocation5], %s363
        %p365 = pneg %p154
        %p366 = pneg %p151
        %p367 = scmp.lt.s32.totalorder %s32, 1
        %s368 = scalar_select %p367, %s32, 1
        %s369 = scalar_lea.vmem %s5, %s368
        %p370 = pneg %p180
        %p371 = pneg %p177
        %p372 = scmp.lt.s32.totalorder %s32, 1
        %s373 = scalar_select %p372, %s32, 1
        %s374 = scalar_lea.vmem %s6, %s373
        %p375 = pneg %p206
        %p376 = pneg %p203
        %p377 = pneg %p232
        %p378 = pneg %p229
        %s379 = sand.u32 %s219, 1
        %s380 = scalar_lea.sflag [#allocation4], %s379
        %s381 = sand.u32 %s219, 1
        %s382 = smul.addr %s381, 8
        %s383 = scalar_lea.vmem [#allocation7], %s382
        %p384 = scmp.lt.s32.totalorder %s31, 1
        %s385 = scalar_select %p384, %s31, 1
        %s386 = smul.addr %s385, 4
        %s387 = scalar_lea.vmem %s0, %s386
        %p388 = scmp.lt.s32.totalorder %s32, 1
        %s389 = scalar_select %p388, %s32, 1
        %s390 = scalar_lea.vmem %s5, %s389
        %p391 = scmp.lt.s32.totalorder %s32, 1
        %s392 = scalar_select %p391, %s32, 1
        %s393 = scalar_lea.vmem %s6, %s392
        %p395 = scmp.eq.s32.totalorder %s32, 0
        // Predicated region
        $region57: #{cnn_encoder_forward.1} parent=47 // pred_check
          %p396 = pneg %p395
        $region58: #{cnn_encoder_forward.1} parent=47 // pred_check_branch
          %398 = sbr.rel (%p396) target = $region60
        $region59: #{cnn_encoder_forward.1} parent=47 // pred_region
          %v399 = vld [vmem:[%s387] sm:$0xf]
          %v400 = vld [vmem:[%s1] sm:$0xf]
          %v401 = vld [vmem:[%s1 + $0x4] sm:$0xf]
          %v402 = vld [vmem:[%s1 + $0x8] sm:$0xf]
          %v403 = vld [vmem:[%s1 + $0xc] sm:$0xf]
          %v404 = vld [vmem:[%s1 + $0x10] sm:$0xf]
          %v405 = vld [vmem:[%s1 + $0x14] sm:$0xf]
          %v406 = vld [vmem:[%s1 + $0x18] sm:$0xf]
          %v407 = vld [vmem:[%s1 + $0x1c] sm:$0xf]
          %v408 = vld [vmem:[%s1 + $0x20] sm:$0xf]
          %v409 = vld [vmem:[%s1 + $0x24] sm:$0xf]
          %v410 = vld [vmem:[%s1 + $0x28] sm:$0xf]
          %v411 = vld [vmem:[%s1 + $0x2c] sm:$0xf]
          %v412 = vld [vmem:[%s1 + $0x30] sm:$0xf]
          %v413 = vld [vmem:[%s1 + $0x34] sm:$0xf]
          %v414 = vld [vmem:[%s1 + $0x38] sm:$0xf]
          %v415 = vld [vmem:[%s1 + $0x3c] sm:$0xf]
          %v416 = vld [vmem:[%s2] sm:$0x1]
          %v418 = vlaneseq
          %v419 = vshrl.u32 %v418, 7
          %v420 = vsub.s32 0, %v419
          %v421 = vrot.slane %v416, %v420
          %v439 = vunpack.c.l.b16 %v400
          %v440 = vunpack.c.l.b16 %v401
          %v441 = vunpack.c.l.b16 %v402
          %v442 = vunpack.c.l.b16 %v403
          %v443 = vunpack.c.l.b16 %v404
          %v444 = vunpack.c.l.b16 %v405
          %v445 = vunpack.c.l.b16 %v406
          %v446 = vunpack.c.l.b16 %v407
          %v447 = vunpack.c.l.b16 %v408
          %v448 = vunpack.c.l.b16 %v409
          %v449 = vunpack.c.l.b16 %v410
          %v450 = vunpack.c.l.b16 %v411
          %v451 = vunpack.c.l.b16 %v412
          %v452 = vunpack.c.l.b16 %v413
          %v453 = vunpack.c.l.b16 %v414
          %v454 = vunpack.c.l.b16 %v415
          %v455 = vpack.c.b16 %v440, %v439
          %v456 = vpack.c.b16 %v442, %v441
          %v457 = vpack.c.b16 %v444, %v443
          %v458 = vpack.c.b16 %v446, %v445
          %v459 = vpack.c.b16 %v448, %v447
          %v460 = vpack.c.b16 %v450, %v449
          %v461 = vpack.c.b16 %v452, %v451
          %v462 = vpack.c.b16 %v454, %v453
          %471 = vmatprep.subr.bf16.mxu0 0
          %472 = vmatpush1.bf16.msra.mxu0 %v462
          %473 = vmatprep.subr.bf16.mxu0 0
          %474 = vmatpush1.bf16.msra.mxu0 %v461
          %475 = vmatprep.subr.bf16.mxu0 0
          %476 = vmatpush1.bf16.msra.mxu0 %v460
          %477 = vmatprep.subr.bf16.mxu0 0
          %478 = vmatpush1.bf16.msra.mxu0 %v459
          %479 = vmatprep.subr.bf16.mxu0 0
          %480 = vmatpush1.bf16.msra.mxu0 %v458
          %481 = vmatprep.subr.bf16.mxu0 0
          %482 = vmatpush1.bf16.msra.mxu0 %v457
          %483 = vmatprep.subr.bf16.mxu0 0
          %484 = vmatpush1.bf16.msra.mxu0 %v456
          %485 = vmatprep.subr.bf16.mxu0 0
          %486 = vmatpush1.bf16.msra.mxu0 %v455
          %487 = vmatprep.subr.bf16.mxu0 0
          %488 = vmatpush2.bf16.msra.mxu0 0
          %489 = vmatprep.subr.bf16.mxu0 0
          %490 = vmatpush2.bf16.msra.mxu0 0
          %491 = vmatprep.subr.bf16.mxu0 0
          %492 = vmatpush2.bf16.msra.mxu0 0
          %493 = vmatprep.subr.bf16.mxu0 0
          %494 = vmatpush2.bf16.msra.mxu0 0
          %495 = vmatprep.subr.bf16.mxu0 0
          %496 = vmatpush2.bf16.msra.mxu0 0
          %497 = vmatprep.subr.bf16.mxu0 0
          %498 = vmatpush2.bf16.msra.mxu0 0
          %499 = vmatprep.subr.bf16.mxu0 0
          %500 = vmatpush2.bf16.msra.mxu0 0
          %501 = vmatprep.subr.bf16.mxu0 0
          %502 = vmatpush2.bf16.msra.mxu0 0
          %503 = vmatprep.mubr.bf16.mxu0 0
          %504 = vmatmul.mubr.bf16.gmra.mxu0 %v399
          %v505 = vpop.f32.mrf.mxu0
          %v506 = vadd.f32 %v421, %v505
          %v507 = vpop.f32.mrf.mxu0
          %v508 = vpop.f32.mrf.mxu0
          %v509 = vpop.f32.mrf.mxu0
          %510 = vdwg.mxu0
          %511 = vst [vmem:[%s383] sm:$0xff] %v506
        $region60: #{cnn_encoder_forward.1} parent=47 // pred_fallthru
          _
        %v512 = vld [vmem:[%s383] sm:$0xff]
        %v513 = vlaneseq
        %v514 = vshrl.u32 %v513, 7
        %vm515 = vcmp.lt.s32.totalorder %v514, 0
        %v516 = vsub.s32 0, %v514
        %v517 = vsel %vm515, %v516, %v514
        %v518 = vshrl.u32 %v517, 3
        %v519 = vand.u32 %v517, 7
        %v520 = vsub.s32 0, %v519
        %v521 = vsel %vm515, %v520, %v519
        %vm522 = vcmp.ne.s32.totalorder %v521, 0
        %vm523 = vcmp.lt.s32.totalorder %v521, 0
        %vm524 = vmand %vm523, %vm522
        %v525 = vadd.s32 %v521, 8
        %v526 = vsel %vm524, %v525, %v521
        %v527 = vld [vmem:[%s390] sm:$0x1]
        %v529 = vlaneseq
        %v530 = vshrl.u32 %v529, 7
        %v531 = vsub.s32 0, %v530
        %v532 = vrot.slane %v527, %v531
        %v534 = vadd.f32 %v532, 0.0
        %v535 = vld [vmem:[%s393] sm:$0x1]
        %v537 = vlaneseq
        %v538 = vshrl.u32 %v537, 7
        %v539 = vsub.s32 0, %v538
        %v540 = vrot.slane %v535, %v539
        %v542 = vadd.f32 %v540, 0.0
        %v543 = vpack.c.bf16 %v512, %v512
        %s544 = scalar_lea.vmem %s329, 128 [#allocation2]
        %v545 = vld [vmem:[%s544] sm:$0xf]
        %v546 = vld [vmem:[%s544 + $0x4] sm:$0xf]
        %v547 = vld [vmem:[%s544 + $0x8] sm:$0xf]
        %v548 = vld [vmem:[%s544 + $0xc] sm:$0xf]
        %v549 = vld [vmem:[%s544 + $0x10] sm:$0xf]
        %v550 = vld [vmem:[%s544 + $0x14] sm:$0xf]
        %v551 = vld [vmem:[%s544 + $0x18] sm:$0xf]
        %v552 = vld [vmem:[%s544 + $0x1c] sm:$0xf]
        %v553 = vld [vmem:[%s544 + $0x20] sm:$0xf]
        %v554 = vld [vmem:[%s544 + $0x24] sm:$0xf]
        %v555 = vld [vmem:[%s544 + $0x28] sm:$0xf]
        %v556 = vld [vmem:[%s544 + $0x2c] sm:$0xf]
        %v557 = vld [vmem:[%s544 + $0x30] sm:$0xf]
        %v558 = vld [vmem:[%s544 + $0x34] sm:$0xf]
        %v559 = vld [vmem:[%s544 + $0x38] sm:$0xf]
        %v560 = vld [vmem:[%s544 + $0x3c] sm:$0xf]
        %v577 = vunpack.c.l.b16 %v545
        %v578 = vunpack.c.l.b16 %v546
        %v579 = vunpack.c.l.b16 %v547
        %v580 = vunpack.c.l.b16 %v548
        %v581 = vunpack.c.l.b16 %v549
        %v582 = vunpack.c.l.b16 %v550
        %v583 = vunpack.c.l.b16 %v551
        %v584 = vunpack.c.l.b16 %v552
        %v585 = vunpack.c.l.b16 %v553
        %v586 = vunpack.c.l.b16 %v554
        %v587 = vunpack.c.l.b16 %v555
        %v588 = vunpack.c.l.b16 %v556
        %v589 = vunpack.c.l.b16 %v557
        %v590 = vunpack.c.l.b16 %v558
        %v591 = vunpack.c.l.b16 %v559
        %v592 = vunpack.c.l.b16 %v560
        %v593 = vpack.c.b16 %v578, %v577
        %v594 = vpack.c.b16 %v580, %v579
        %v595 = vpack.c.b16 %v582, %v581
        %v596 = vpack.c.b16 %v584, %v583
        %v597 = vpack.c.b16 %v586, %v585
        %v598 = vpack.c.b16 %v588, %v587
        %v599 = vpack.c.b16 %v590, %v589
        %v600 = vpack.c.b16 %v592, %v591
        %609 = vmatprep.subr.bf16.mxu0 0
        %610 = vmatpush1.bf16.msra.mxu0 %v600
        %611 = vmatprep.subr.bf16.mxu0 0
        %612 = vmatpush1.bf16.msra.mxu0 %v599
        %613 = vmatprep.subr.bf16.mxu0 0
        %614 = vmatpush1.bf16.msra.mxu0 %v598
        %615 = vmatprep.subr.bf16.mxu0 0
        %616 = vmatpush1.bf16.msra.mxu0 %v597
        %617 = vmatprep.subr.bf16.mxu0 0
        %618 = vmatpush1.bf16.msra.mxu0 %v596
        %619 = vmatprep.subr.bf16.mxu0 0
        %620 = vmatpush1.bf16.msra.mxu0 %v595
        %621 = vmatprep.subr.bf16.mxu0 0
        %622 = vmatpush1.bf16.msra.mxu0 %v594
        %623 = vmatprep.subr.bf16.mxu0 0
        %624 = vmatpush1.bf16.msra.mxu0 %v593
        %625 = vmatprep.subr.bf16.mxu0 0
        %626 = vmatpush2.bf16.msra.mxu0 0
        %627 = vmatprep.subr.bf16.mxu0 0
        %628 = vmatpush2.bf16.msra.mxu0 0
        %629 = vmatprep.subr.bf16.mxu0 0
        %630 = vmatpush2.bf16.msra.mxu0 0
        %631 = vmatprep.subr.bf16.mxu0 0
        %632 = vmatpush2.bf16.msra.mxu0 0
        %633 = vmatprep.subr.bf16.mxu0 0
        %634 = vmatpush2.bf16.msra.mxu0 0
        %635 = vmatprep.subr.bf16.mxu0 0
        %636 = vmatpush2.bf16.msra.mxu0 0
        %637 = vmatprep.subr.bf16.mxu0 0
        %638 = vmatpush2.bf16.msra.mxu0 0
        %639 = vmatprep.subr.bf16.mxu0 0
        %640 = vmatpush2.bf16.msra.mxu0 0
        %641 = vmatprep.mubr.bf16.mxu0 0
        %642 = vmatmul.mubr.bf16.gmra.mxu0 %v543
        %v643 = vpop.f32.mrf.mxu0
        %v644 = vadd.f32 0.0, %v643
        %v645 = vpop.f32.mrf.mxu0
        %v646 = vpop.f32.mrf.mxu0
        %v647 = vpop.f32.mrf.mxu0
        %648 = vdwg.mxu0
        %v649 = vadd.f32 %v534, %v644
        %s650 = scalar_lea.vmem %s338, 128 [#allocation5]
        %v651 = vld [vmem:[%s650] sm:$0xf]
        %v652 = vld [vmem:[%s650 + $0x4] sm:$0xf]
        %v653 = vld [vmem:[%s650 + $0x8] sm:$0xf]
        %v654 = vld [vmem:[%s650 + $0xc] sm:$0xf]
        %v655 = vld [vmem:[%s650 + $0x10] sm:$0xf]
        %v656 = vld [vmem:[%s650 + $0x14] sm:$0xf]
        %v657 = vld [vmem:[%s650 + $0x18] sm:$0xf]
        %v658 = vld [vmem:[%s650 + $0x1c] sm:$0xf]
        %v659 = vld [vmem:[%s650 + $0x20] sm:$0xf]
        %v660 = vld [vmem:[%s650 + $0x24] sm:$0xf]
        %v661 = vld [vmem:[%s650 + $0x28] sm:$0xf]
        %v662 = vld [vmem:[%s650 + $0x2c] sm:$0xf]
        %v663 = vld [vmem:[%s650 + $0x30] sm:$0xf]
        %v664 = vld [vmem:[%s650 + $0x34] sm:$0xf]
        %v665 = vld [vmem:[%s650 + $0x38] sm:$0xf]
        %v666 = vld [vmem:[%s650 + $0x3c] sm:$0xf]
        %v683 = vunpack.c.l.b16 %v651
        %v684 = vunpack.c.l.b16 %v652
        %v685 = vunpack.c.l.b16 %v653
        %v686 = vunpack.c.l.b16 %v654
        %v687 = vunpack.c.l.b16 %v655
        %v688 = vunpack.c.l.b16 %v656
        %v689 = vunpack.c.l.b16 %v657
        %v690 = vunpack.c.l.b16 %v658
        %v691 = vunpack.c.l.b16 %v659
        %v692 = vunpack.c.l.b16 %v660
        %v693 = vunpack.c.l.b16 %v661
        %v694 = vunpack.c.l.b16 %v662
        %v695 = vunpack.c.l.b16 %v663
        %v696 = vunpack.c.l.b16 %v664
        %v697 = vunpack.c.l.b16 %v665
        %v698 = vunpack.c.l.b16 %v666
        %v699 = vpack.c.b16 %v684, %v683
        %v700 = vpack.c.b16 %v686, %v685
        %v701 = vpack.c.b16 %v688, %v687
        %v702 = vpack.c.b16 %v690, %v689
        %v703 = vpack.c.b16 %v692, %v691
        %v704 = vpack.c.b16 %v694, %v693
        %v705 = vpack.c.b16 %v696, %v695
        %v706 = vpack.c.b16 %v698, %v697
        %715 = vmatprep.subr.bf16.mxu0 0
        %716 = vmatpush1.bf16.msra.mxu0 %v706
        %717 = vmatprep.subr.bf16.mxu0 0
        %718 = vmatpush1.bf16.msra.mxu0 %v705
        %719 = vmatprep.subr.bf16.mxu0 0
        %720 = vmatpush1.bf16.msra.mxu0 %v704
        %721 = vmatprep.subr.bf16.mxu0 0
        %722 = vmatpush1.bf16.msra.mxu0 %v703
        %723 = vmatprep.subr.bf16.mxu0 0
        %724 = vmatpush1.bf16.msra.mxu0 %v702
        %725 = vmatprep.subr.bf16.mxu0 0
        %726 = vmatpush1.bf16.msra.mxu0 %v701
        %727 = vmatprep.subr.bf16.mxu0 0
        %728 = vmatpush1.bf16.msra.mxu0 %v700
        %729 = vmatprep.subr.bf16.mxu0 0
        %730 = vmatpush1.bf16.msra.mxu0 %v699
        %731 = vmatprep.subr.bf16.mxu0 0
        %732 = vmatpush2.bf16.msra.mxu0 0
        %733 = vmatprep.subr.bf16.mxu0 0
        %734 = vmatpush2.bf16.msra.mxu0 0
        %735 = vmatprep.subr.bf16.mxu0 0
        %736 = vmatpush2.bf16.msra.mxu0 0
        %737 = vmatprep.subr.bf16.mxu0 0
        %738 = vmatpush2.bf16.msra.mxu0 0
        %739 = vmatprep.subr.bf16.mxu0 0
        %740 = vmatpush2.bf16.msra.mxu0 0
        %741 = vmatprep.subr.bf16.mxu0 0
        %742 = vmatpush2.bf16.msra.mxu0 0
        %743 = vmatprep.subr.bf16.mxu0 0
        %744 = vmatpush2.bf16.msra.mxu0 0
        %745 = vmatprep.subr.bf16.mxu0 0
        %746 = vmatpush2.bf16.msra.mxu0 0
        %747 = vmatprep.mubr.bf16.mxu0 0
        %748 = vmatmul.mubr.bf16.gmra.mxu0 %v543
        %v749 = vpop.f32.mrf.mxu0
        %v750 = vadd.f32 0.0, %v749
        %v751 = vpop.f32.mrf.mxu0
        %v752 = vpop.f32.mrf.mxu0
        %v753 = vpop.f32.mrf.mxu0
        %754 = vdwg.mxu0
        %v755 = vadd.f32 %v542, %v750
        %vm756 = vcmp.ge.s32.totalorder %v526, 1
        %v757 = vrot.slane %v512, 7
        %v758 = vsel %vm756, %v757, 0.0
        %v759 = vpack.c.bf16 %v758, %v758
        %s760 = scalar_lea.vmem %s329, 64 [#allocation2]
        %v761 = vld [vmem:[%s760] sm:$0xf]
        %v762 = vld [vmem:[%s760 + $0x4] sm:$0xf]
        %v763 = vld [vmem:[%s760 + $0x8] sm:$0xf]
        %v764 = vld [vmem:[%s760 + $0xc] sm:$0xf]
        %v765 = vld [vmem:[%s760 + $0x10] sm:$0xf]
        %v766 = vld [vmem:[%s760 + $0x14] sm:$0xf]
        %v767 = vld [vmem:[%s760 + $0x18] sm:$0xf]
        %v768 = vld [vmem:[%s760 + $0x1c] sm:$0xf]
        %v769 = vld [vmem:[%s760 + $0x20] sm:$0xf]
        %v770 = vld [vmem:[%s760 + $0x24] sm:$0xf]
        %v771 = vld [vmem:[%s760 + $0x28] sm:$0xf]
        %v772 = vld [vmem:[%s760 + $0x2c] sm:$0xf]
        %v773 = vld [vmem:[%s760 + $0x30] sm:$0xf]
        %v774 = vld [vmem:[%s760 + $0x34] sm:$0xf]
        %v775 = vld [vmem:[%s760 + $0x38] sm:$0xf]
        %v776 = vld [vmem:[%s760 + $0x3c] sm:$0xf]
        %v793 = vunpack.c.l.b16 %v761
        %v794 = vunpack.c.l.b16 %v762
        %v795 = vunpack.c.l.b16 %v763
        %v796 = vunpack.c.l.b16 %v764
        %v797 = vunpack.c.l.b16 %v765
        %v798 = vunpack.c.l.b16 %v766
        %v799 = vunpack.c.l.b16 %v767
        %v800 = vunpack.c.l.b16 %v768
        %v801 = vunpack.c.l.b16 %v769
        %v802 = vunpack.c.l.b16 %v770
        %v803 = vunpack.c.l.b16 %v771
        %v804 = vunpack.c.l.b16 %v772
        %v805 = vunpack.c.l.b16 %v773
        %v806 = vunpack.c.l.b16 %v774
        %v807 = vunpack.c.l.b16 %v775
        %v808 = vunpack.c.l.b16 %v776
        %v809 = vpack.c.b16 %v794, %v793
        %v810 = vpack.c.b16 %v796, %v795
        %v811 = vpack.c.b16 %v798, %v797
        %v812 = vpack.c.b16 %v800, %v799
        %v813 = vpack.c.b16 %v802, %v801
        %v814 = vpack.c.b16 %v804, %v803
        %v815 = vpack.c.b16 %v806, %v805
        %v816 = vpack.c.b16 %v808, %v807
        %825 = vmatprep.subr.bf16.mxu0 0
        %826 = vmatpush1.bf16.msra.mxu0 %v816
        %827 = vmatprep.subr.bf16.mxu0 0
        %828 = vmatpush1.bf16.msra.mxu0 %v815
        %829 = vmatprep.subr.bf16.mxu0 0
        %830 = vmatpush1.bf16.msra.mxu0 %v814
        %831 = vmatprep.subr.bf16.mxu0 0
        %832 = vmatpush1.bf16.msra.mxu0 %v813
        %833 = vmatprep.subr.bf16.mxu0 0
        %834 = vmatpush1.bf16.msra.mxu0 %v812
        %835 = vmatprep.subr.bf16.mxu0 0
        %836 = vmatpush1.bf16.msra.mxu0 %v811
        %837 = vmatprep.subr.bf16.mxu0 0
        %838 = vmatpush1.bf16.msra.mxu0 %v810
        %839 = vmatprep.subr.bf16.mxu0 0
        %840 = vmatpush1.bf16.msra.mxu0 %v809
        %841 = vmatprep.subr.bf16.mxu0 0
        %842 = vmatpush2.bf16.msra.mxu0 0
        %843 = vmatprep.subr.bf16.mxu0 0
        %844 = vmatpush2.bf16.msra.mxu0 0
        %845 = vmatprep.subr.bf16.mxu0 0
        %846 = vmatpush2.bf16.msra.mxu0 0
        %847 = vmatprep.subr.bf16.mxu0 0
        %848 = vmatpush2.bf16.msra.mxu0 0
        %849 = vmatprep.subr.bf16.mxu0 0
        %850 = vmatpush2.bf16.msra.mxu0 0
        %851 = vmatprep.subr.bf16.mxu0 0
        %852 = vmatpush2.bf16.msra.mxu0 0
        %853 = vmatprep.subr.bf16.mxu0 0
        %854 = vmatpush2.bf16.msra.mxu0 0
        %855 = vmatprep.subr.bf16.mxu0 0
        %856 = vmatpush2.bf16.msra.mxu0 0
        %857 = vmatprep.mubr.bf16.mxu0 0
        %858 = vmatmul.mubr.bf16.gmra.mxu0 %v759
        %v859 = vpop.f32.mrf.mxu0
        %v860 = vadd.f32 0.0, %v859
        %v861 = vpop.f32.mrf.mxu0
        %v862 = vpop.f32.mrf.mxu0
        %v863 = vpop.f32.mrf.mxu0
        %864 = vdwg.mxu0
        %v865 = vadd.f32 %v649, %v860
        %s866 = scalar_lea.vmem %s338, 64 [#allocation5]
        %v867 = vld [vmem:[%s866] sm:$0xf]
        %v868 = vld [vmem:[%s866 + $0x4] sm:$0xf]
        %v869 = vld [vmem:[%s866 + $0x8] sm:$0xf]
        %v870 = vld [vmem:[%s866 + $0xc] sm:$0xf]
        %v871 = vld [vmem:[%s866 + $0x10] sm:$0xf]
        %v872 = vld [vmem:[%s866 + $0x14] sm:$0xf]
        %v873 = vld [vmem:[%s866 + $0x18] sm:$0xf]
        %v874 = vld [vmem:[%s866 + $0x1c] sm:$0xf]
        %v875 = vld [vmem:[%s866 + $0x20] sm:$0xf]
        %v876 = vld [vmem:[%s866 + $0x24] sm:$0xf]
        %v877 = vld [vmem:[%s866 + $0x28] sm:$0xf]
        %v878 = vld [vmem:[%s866 + $0x2c] sm:$0xf]
        %v879 = vld [vmem:[%s866 + $0x30] sm:$0xf]
        %v880 = vld [vmem:[%s866 + $0x34] sm:$0xf]
        %v881 = vld [vmem:[%s866 + $0x38] sm:$0xf]
        %v882 = vld [vmem:[%s866 + $0x3c] sm:$0xf]
        %v899 = vunpack.c.l.b16 %v867
        %v900 = vunpack.c.l.b16 %v868
        %v901 = vunpack.c.l.b16 %v869
        %v902 = vunpack.c.l.b16 %v870
        %v903 = vunpack.c.l.b16 %v871
        %v904 = vunpack.c.l.b16 %v872
        %v905 = vunpack.c.l.b16 %v873
        %v906 = vunpack.c.l.b16 %v874
        %v907 = vunpack.c.l.b16 %v875
        %v908 = vunpack.c.l.b16 %v876
        %v909 = vunpack.c.l.b16 %v877
        %v910 = vunpack.c.l.b16 %v878
        %v911 = vunpack.c.l.b16 %v879
        %v912 = vunpack.c.l.b16 %v880
        %v913 = vunpack.c.l.b16 %v881
        %v914 = vunpack.c.l.b16 %v882
        %v915 = vpack.c.b16 %v900, %v899
        %v916 = vpack.c.b16 %v902, %v901
        %v917 = vpack.c.b16 %v904, %v903
        %v918 = vpack.c.b16 %v906, %v905
        %v919 = vpack.c.b16 %v908, %v907
        %v920 = vpack.c.b16 %v910, %v909
        %v921 = vpack.c.b16 %v912, %v911
        %v922 = vpack.c.b16 %v914, %v913
        %931 = vmatprep.subr.bf16.mxu0 0
        %932 = vmatpush1.bf16.msra.mxu0 %v922
        %933 = vmatprep.subr.bf16.mxu0 0
        %934 = vmatpush1.bf16.msra.mxu0 %v921
        %935 = vmatprep.subr.bf16.mxu0 0
        %936 = vmatpush1.bf16.msra.mxu0 %v920
        %937 = vmatprep.subr.bf16.mxu0 0
        %938 = vmatpush1.bf16.msra.mxu0 %v919
        %939 = vmatprep.subr.bf16.mxu0 0
        %940 = vmatpush1.bf16.msra.mxu0 %v918
        %941 = vmatprep.subr.bf16.mxu0 0
        %942 = vmatpush1.bf16.msra.mxu0 %v917
        %943 = vmatprep.subr.bf16.mxu0 0
        %944 = vmatpush1.bf16.msra.mxu0 %v916
        %945 = vmatprep.subr.bf16.mxu0 0
        %946 = vmatpush1.bf16.msra.mxu0 %v915
        %947 = vmatprep.subr.bf16.mxu0 0
        %948 = vmatpush2.bf16.msra.mxu0 0
        %949 = vmatprep.subr.bf16.mxu0 0
        %950 = vmatpush2.bf16.msra.mxu0 0
        %951 = vmatprep.subr.bf16.mxu0 0
        %952 = vmatpush2.bf16.msra.mxu0 0
        %953 = vmatprep.subr.bf16.mxu0 0
        %954 = vmatpush2.bf16.msra.mxu0 0
        %955 = vmatprep.subr.bf16.mxu0 0
        %956 = vmatpush2.bf16.msra.mxu0 0
        %957 = vmatprep.subr.bf16.mxu0 0
        %958 = vmatpush2.bf16.msra.mxu0 0
        %959 = vmatprep.subr.bf16.mxu0 0
        %960 = vmatpush2.bf16.msra.mxu0 0
        %961 = vmatprep.subr.bf16.mxu0 0
        %962 = vmatpush2.bf16.msra.mxu0 0
        %963 = vmatprep.mubr.bf16.mxu0 0
        %964 = vmatmul.mubr.bf16.gmra.mxu0 %v759
        %v965 = vpop.f32.mrf.mxu0
        %v966 = vadd.f32 0.0, %v965
        %v967 = vpop.f32.mrf.mxu0
        %v968 = vpop.f32.mrf.mxu0
        %v969 = vpop.f32.mrf.mxu0
        %970 = vdwg.mxu0
        %v971 = vadd.f32 %v755, %v966
        %vm972 = vcmp.ge.s32.totalorder %v526, 2
        %v973 = vrot.slane %v512, 6
        %v974 = vsel %vm972, %v973, 0.0
        %v975 = vpack.c.bf16 %v974, %v974
        %v976 = vld [vmem:[%s329] sm:$0xf]
        %v977 = vld [vmem:[%s329 + $0x4] sm:$0xf]
        %v978 = vld [vmem:[%s329 + $0x8] sm:$0xf]
        %v979 = vld [vmem:[%s329 + $0xc] sm:$0xf]
        %v980 = vld [vmem:[%s329 + $0x10] sm:$0xf]
        %v981 = vld [vmem:[%s329 + $0x14] sm:$0xf]
        %v982 = vld [vmem:[%s329 + $0x18] sm:$0xf]
        %v983 = vld [vmem:[%s329 + $0x1c] sm:$0xf]
        %v984 = vld [vmem:[%s329 + $0x20] sm:$0xf]
        %v985 = vld [vmem:[%s329 + $0x24] sm:$0xf]
        %v986 = vld [vmem:[%s329 + $0x28] sm:$0xf]
        %v987 = vld [vmem:[%s329 + $0x2c] sm:$0xf]
        %v988 = vld [vmem:[%s329 + $0x30] sm:$0xf]
        %v989 = vld [vmem:[%s329 + $0x34] sm:$0xf]
        %v990 = vld [vmem:[%s329 + $0x38] sm:$0xf]
        %v991 = vld [vmem:[%s329 + $0x3c] sm:$0xf]
        %v1008 = vunpack.c.l.b16 %v976
        %v1009 = vunpack.c.l.b16 %v977
        %v1010 = vunpack.c.l.b16 %v978
        %v1011 = vunpack.c.l.b16 %v979
        %v1012 = vunpack.c.l.b16 %v980
        %v1013 = vunpack.c.l.b16 %v981
        %v1014 = vunpack.c.l.b16 %v982
        %v1015 = vunpack.c.l.b16 %v983
        %v1016 = vunpack.c.l.b16 %v984
        %v1017 = vunpack.c.l.b16 %v985
        %v1018 = vunpack.c.l.b16 %v986
        %v1019 = vunpack.c.l.b16 %v987
        %v1020 = vunpack.c.l.b16 %v988
        %v1021 = vunpack.c.l.b16 %v989
        %v1022 = vunpack.c.l.b16 %v990
        %v1023 = vunpack.c.l.b16 %v991
        %v1024 = vpack.c.b16 %v1009, %v1008
        %v1025 = vpack.c.b16 %v1011, %v1010
        %v1026 = vpack.c.b16 %v1013, %v1012
        %v1027 = vpack.c.b16 %v1015, %v1014
        %v1028 = vpack.c.b16 %v1017, %v1016
        %v1029 = vpack.c.b16 %v1019, %v1018
        %v1030 = vpack.c.b16 %v1021, %v1020
        %v1031 = vpack.c.b16 %v1023, %v1022
        %1040 = vmatprep.subr.bf16.mxu0 0
        %1041 = vmatpush1.bf16.msra.mxu0 %v1031
        %1042 = vmatprep.subr.bf16.mxu0 0
        %1043 = vmatpush1.bf16.msra.mxu0 %v1030
        %1044 = vmatprep.subr.bf16.mxu0 0
        %1045 = vmatpush1.bf16.msra.mxu0 %v1029
        %1046 = vmatprep.subr.bf16.mxu0 0
        %1047 = vmatpush1.bf16.msra.mxu0 %v1028
        %1048 = vmatprep.subr.bf16.mxu0 0
        %1049 = vmatpush1.bf16.msra.mxu0 %v1027
        %1050 = vmatprep.subr.bf16.mxu0 0
        %1051 = vmatpush1.bf16.msra.mxu0 %v1026
        %1052 = vmatprep.subr.bf16.mxu0 0
        %1053 = vmatpush1.bf16.msra.mxu0 %v1025
        %1054 = vmatprep.subr.bf16.mxu0 0
        %1055 = vmatpush1.bf16.msra.mxu0 %v1024
        %1056 = vmatprep.subr.bf16.mxu0 0
        %1057 = vmatpush2.bf16.msra.mxu0 0
        %1058 = vmatprep.subr.bf16.mxu0 0
        %1059 = vmatpush2.bf16.msra.mxu0 0
        %1060 = vmatprep.subr.bf16.mxu0 0
        %1061 = vmatpush2.bf16.msra.mxu0 0
        %1062 = vmatprep.subr.bf16.mxu0 0
        %1063 = vmatpush2.bf16.msra.mxu0 0
        %1064 = vmatprep.subr.bf16.mxu0 0
        %1065 = vmatpush2.bf16.msra.mxu0 0
        %1066 = vmatprep.subr.bf16.mxu0 0
        %1067 = vmatpush2.bf16.msra.mxu0 0
        %1068 = vmatprep.subr.bf16.mxu0 0
        %1069 = vmatpush2.bf16.msra.mxu0 0
        %1070 = vmatprep.subr.bf16.mxu0 0
        %1071 = vmatpush2.bf16.msra.mxu0 0
        %1072 = vmatprep.mubr.bf16.mxu0 0
        %1073 = vmatmul.mubr.bf16.gmra.mxu0 %v975
        %v1074 = vpop.f32.mrf.mxu0
        %v1075 = vadd.f32 0.0, %v1074
        %v1076 = vpop.f32.mrf.mxu0
        %v1077 = vpop.f32.mrf.mxu0
        %v1078 = vpop.f32.mrf.mxu0
        %1079 = vdwg.mxu0
        %v1080 = vadd.f32 %v865, %v1075
        %v1081 = vld [vmem:[%s338] sm:$0xf]
        %v1082 = vld [vmem:[%s338 + $0x4] sm:$0xf]
        %v1083 = vld [vmem:[%s338 + $0x8] sm:$0xf]
        %v1084 = vld [vmem:[%s338 + $0xc] sm:$0xf]
        %v1085 = vld [vmem:[%s338 + $0x10] sm:$0xf]
        %v1086 = vld [vmem:[%s338 + $0x14] sm:$0xf]
        %v1087 = vld [vmem:[%s338 + $0x18] sm:$0xf]
        %v1088 = vld [vmem:[%s338 + $0x1c] sm:$0xf]
        %v1089 = vld [vmem:[%s338 + $0x20] sm:$0xf]
        %v1090 = vld [vmem:[%s338 + $0x24] sm:$0xf]
        %v1091 = vld [vmem:[%s338 + $0x28] sm:$0xf]
        %v1092 = vld [vmem:[%s338 + $0x2c] sm:$0xf]
        %v1093 = vld [vmem:[%s338 + $0x30] sm:$0xf]
        %v1094 = vld [vmem:[%s338 + $0x34] sm:$0xf]
        %v1095 = vld [vmem:[%s338 + $0x38] sm:$0xf]
        %v1096 = vld [vmem:[%s338 + $0x3c] sm:$0xf]
        %v1113 = vunpack.c.l.b16 %v1081
        %v1114 = vunpack.c.l.b16 %v1082
        %v1115 = vunpack.c.l.b16 %v1083
        %v1116 = vunpack.c.l.b16 %v1084
        %v1117 = vunpack.c.l.b16 %v1085
        %v1118 = vunpack.c.l.b16 %v1086
        %v1119 = vunpack.c.l.b16 %v1087
        %v1120 = vunpack.c.l.b16 %v1088
        %v1121 = vunpack.c.l.b16 %v1089
        %v1122 = vunpack.c.l.b16 %v1090
        %v1123 = vunpack.c.l.b16 %v1091
        %v1124 = vunpack.c.l.b16 %v1092
        %v1125 = vunpack.c.l.b16 %v1093
        %v1126 = vunpack.c.l.b16 %v1094
        %v1127 = vunpack.c.l.b16 %v1095
        %v1128 = vunpack.c.l.b16 %v1096
        %v1129 = vpack.c.b16 %v1114, %v1113
        %v1130 = vpack.c.b16 %v1116, %v1115
        %v1131 = vpack.c.b16 %v1118, %v1117
        %v1132 = vpack.c.b16 %v1120, %v1119
        %v1133 = vpack.c.b16 %v1122, %v1121
        %v1134 = vpack.c.b16 %v1124, %v1123
        %v1135 = vpack.c.b16 %v1126, %v1125
        %v1136 = vpack.c.b16 %v1128, %v1127
        %1145 = vmatprep.subr.bf16.mxu0 0
        %1146 = vmatpush1.bf16.msra.mxu0 %v1136
        %1147 = vmatprep.subr.bf16.mxu0 0
        %1148 = vmatpush1.bf16.msra.mxu0 %v1135
        %1149 = vmatprep.subr.bf16.mxu0 0
        %1150 = vmatpush1.bf16.msra.mxu0 %v1134
        %1151 = vmatprep.subr.bf16.mxu0 0
        %1152 = vmatpush1.bf16.msra.mxu0 %v1133
        %1153 = vmatprep.subr.bf16.mxu0 0
        %1154 = vmatpush1.bf16.msra.mxu0 %v1132
        %1155 = vmatprep.subr.bf16.mxu0 0
        %1156 = vmatpush1.bf16.msra.mxu0 %v1131
        %1157 = vmatprep.subr.bf16.mxu0 0
        %1158 = vmatpush1.bf16.msra.mxu0 %v1130
        %1159 = vmatprep.subr.bf16.mxu0 0
        %1160 = vmatpush1.bf16.msra.mxu0 %v1129
        %1161 = vmatprep.subr.bf16.mxu0 0
        %1162 = vmatpush2.bf16.msra.mxu0 0
        %1163 = vmatprep.subr.bf16.mxu0 0
        %1164 = vmatpush2.bf16.msra.mxu0 0
        %1165 = vmatprep.subr.bf16.mxu0 0
        %1166 = vmatpush2.bf16.msra.mxu0 0
        %1167 = vmatprep.subr.bf16.mxu0 0
        %1168 = vmatpush2.bf16.msra.mxu0 0
        %1169 = vmatprep.subr.bf16.mxu0 0
        %1170 = vmatpush2.bf16.msra.mxu0 0
        %1171 = vmatprep.subr.bf16.mxu0 0
        %1172 = vmatpush2.bf16.msra.mxu0 0
        %1173 = vmatprep.subr.bf16.mxu0 0
        %1174 = vmatpush2.bf16.msra.mxu0 0
        %1175 = vmatprep.subr.bf16.mxu0 0
        %1176 = vmatpush2.bf16.msra.mxu0 0
        %1177 = vmatprep.mubr.bf16.mxu0 0
        %1178 = vmatmul.mubr.bf16.gmra.mxu0 %v975
        %v1179 = vpop.f32.mrf.mxu0
        %v1180 = vadd.f32 0.0, %v1179
        %v1181 = vpop.f32.mrf.mxu0
        %v1182 = vpop.f32.mrf.mxu0
        %v1183 = vpop.f32.mrf.mxu0
        %1184 = vdwg.mxu0
        %v1185 = vadd.f32 %v971, %v1180
        %v1186 = vxor.u32 %v1185, 2147483648
        %v1187 = vmul.f32 %v1186, 1.442695
        %v1188 = vpow.pop %v1187
        %v1189 = vadd.f32 %v1188, 1.0
        %v1190 = vrcp.pop %v1189
        %v1191 = vmul.f32 1.0, %v1190
        %v1192 = vmul.f32 %v1080, %v1191
        %v1193 = vadd.f32 %v1192, %v512
        %v1194 = vmul.f32 %v1193, 0.70710677
        %1195 = vst [vmem:[%s383] sm:$0xff] %v1194
        %s1196 = sand.u32 %s219, 1
        %s1197 = scalar_lea.sflag [#allocation4], %s1196
        %s1198 = sand.u32 %s219, 1
        %s1199 = smul.addr %s1198, 8
        %s1200 = scalar_lea.vmem [#allocation7], %s1199
        // Predicated region
        $region61: #{cnn_encoder_forward.1} parent=47 // pred_check
          %p1201 = pneg %p229
        $region62: #{cnn_encoder_forward.1} parent=47 // pred_check_branch
          %1203 = sbr.rel (%p1201) target = $region64
        $region63: #{cnn_encoder_forward.1} parent=47 // pred_region
          %s1205 = ssub.s32 128, 128
          %1206 = vsyncadd %s1197, %s1205
          %s1207 = smul.addr %s31, 128
          %s1208 = scalar_lea.hbm %s7, %s1207
          %s1210 = sshll.u32 %s1200, 4
          %s1211 = int_to_ptr.vmem [resolvable:$true] %s1210
          %1213 = dma.vmem_to_hbm [thread:$0]  %s1211, 128, %s1208, %s1197
        $region64: #{cnn_encoder_forward.1} parent=47 // pred_fallthru
          _
      $region48: #{cnn_encoder_forward.1} parent=5 // pred_fallthru
        _
      %p1214 = scmp.le.s32.totalorder 2, %s22
      // Predicated region
      $region65: #{cnn_encoder_forward.1} parent=5 // pred_check
        %p1215 = pneg %p1214
      $region66: #{cnn_encoder_forward.1} parent=5 // pred_check_branch
        %1217 = sbr.rel (%p1215) target = $region68
      $region67: #{cnn_encoder_forward.1} parent=5 // pred_region
        %s1218 = ssub.s32 %s22, 2
        // Predicated region
        $region69: #{cnn_encoder_forward.1} parent=67 // pred_check
          %p1219 = pneg %p235
        $region70: #{cnn_encoder_forward.1} parent=67 // pred_check_branch
          %1221 = sbr.rel (%p1219) target = $region72
        $region71: #{cnn_encoder_forward.1} parent=67 // pred_region
          %s1222 = sand.u32 %s220, 1
          %s1223 = scalar_lea.sflag [#allocation4], %s1222
          %s1224 = sand.u32 %s220, 1
          %s1225 = smul.addr %s1224, 8
          %s1226 = scalar_lea.vmem [#allocation7], %s1225
          %1227 = dma.done %s1223, 128
        $region72: #{cnn_encoder_forward.1} parent=67 // pred_fallthru
          _
      $region68: #{cnn_encoder_forward.1} parent=5 // pred_fallthru
        _
    $region6: #{cnn_encoder_forward.1} parent=1 // loop_footer
      %s26 = sadd.s32 1, %s22
    $region7: #{cnn_encoder_forward.1} parent=1 // loop_footer_branch
      %21 = sbr.rel target = $region3
    $region8: #{cnn_encoder_forward.1} parent=1 // loop_exit
      _
    %1228 = vsyncpa [#allocation3], 1
    %s1229 = scalar_lea.sflag [#allocation3], 1
    %1230 = vsyncpa %s1229, 1
    %1231 = vsyncpa [#allocation6], 1
    %s1232 = scalar_lea.sflag [#allocation6], 1
    %1233 = vsyncpa %s1232, 1
    %1234 = vsyncpa [#allocation4], 1
    %s1235 = scalar_lea.sflag [#allocation4], 1
    %1236 = vsyncpa %s1235, 1

</llo_original>
